<compile_context>
chip_gen: v7x
topology: tpu7x:2x2x1
jax: 0.10.0
libtpu: 0.0.40
codegen_flags: <defaults>
</compile_context>

<pallas_src>
import functools

import jax
import jax.numpy as jnp
from jax.experimental import pallas as pl
from jax.experimental.pallas import tpu as pltpu


def _round_up(a, b):
    return (a + b - 1) // b * b


def _sublayer_connection_kernel(x_ref, w_ref, b_ref, g_ref, beta_ref, *rest,
                                eps, p, keep_threshold):
    # rest = (bits_ref, o_ref) when dropout is active, else (o_ref,)
    if p > 0.0:
        bits_ref, o_ref = rest
    else:
        (o_ref,) = rest

    # x_ref: (TM, H) tile of tokens; LayerNorm stats in f32.
    x = x_ref[...].astype(jnp.float32)
    h = x.shape[-1]

    # LayerNorm (annotated-transformer style): a_2*(x-mean)/(std+eps)+b_2,
    # std is the unbiased sample std to match torch.Tensor.std() defaults.
    mean = jnp.mean(x, axis=-1, keepdims=True)
    xc = x - mean
    var = jnp.sum(xc * xc, axis=-1, keepdims=True) * (1.0 / float(h - 1))
    inv = 1.0 / (jnp.sqrt(var) + eps)
    normed = (g_ref[...].astype(jnp.float32) * (xc * inv)
              + beta_ref[...].astype(jnp.float32))

    # sublayer: linear feed-forward on the MXU. bf16 operands, f32 accumulate.
    y = jnp.dot(normed.astype(jnp.bfloat16), w_ref[...],
                preferred_element_type=jnp.float32)
    y = y + b_ref[...].astype(jnp.float32)

    # inverted dropout (training semantics), integer-domain compare.
    if p > 0.0:
        keep = bits_ref[...] >= jnp.uint32(keep_threshold)
        y = jnp.where(keep, y * (1.0 / (1.0 - p)), 0.0)

    # residual connection
    o_ref[...] = (x + y).astype(o_ref.dtype)


def sublayer_connection(x, w_bf16, b, gamma, beta, seed, *, dropout_p,
                        eps=1e-6, block_rows=256):
    """x: [B, S, H]; returns x + dropout(linear(layernorm(x))).

    w_bf16 is the [H, H] feed-forward weight, already in bfloat16 (kept
    resident in VMEM in its compute dtype so it is never re-cast per tile).
    For best store throughput H should be a multiple of 128 in real use; the
    small test shape (H=32) exercises masked partial stores only.
    """
    B, S, H = x.shape
    M = B * S
    x2 = x.reshape(M, H)

    # Row tile: large (256) but never larger than the (8-aligned) row count.
    tm = min(block_rows, _round_up(M, 8))
    M_pad = _round_up(M, tm)
    if M_pad != M:
        x2 = jnp.pad(x2, ((0, M_pad - M), (0, 0)))
    grid = (M_pad // tm,)

    p = float(dropout_p)
    keep_threshold = min(int(p * 4294967296.0), 4294967295)  # P(bits>=t) = 1-p

    kernel = functools.partial(_sublayer_connection_kernel, eps=eps, p=p,
                               keep_threshold=keep_threshold)

    in_specs = [
        pl.BlockSpec((tm, H), lambda i: (i, 0)),   # x tile
        pl.BlockSpec((H, H), lambda i: (0, 0)),    # W (resident, bf16)
        pl.BlockSpec((1, H), lambda i: (0, 0)),    # bias
        pl.BlockSpec((1, H), lambda i: (0, 0)),    # ln gamma (a_2)
        pl.BlockSpec((1, H), lambda i: (0, 0)),    # ln beta  (b_2)
    ]
    args = [x2, w_bf16, b, gamma, beta]

    if p > 0.0:
        # Precomputed uniform u32 bits (one per output element).
        key = jax.random.fold_in(jax.random.PRNGKey(0), seed)
        bits = jax.random.bits(key, (M_pad, H), dtype=jnp.uint32)
        in_specs.append(pl.BlockSpec((tm, H), lambda i: (i, 0)))
        args.append(bits)

    out = pl.pallas_call(
        kernel,
        out_shape=jax.ShapeDtypeStruct((M_pad, H), x.dtype),
        grid=grid,
        in_specs=in_specs,
        out_specs=pl.BlockSpec((tm, H), lambda i: (i, 0)),
        compiler_params=pltpu.CompilerParams(
            dimension_semantics=("parallel",),
            vmem_limit_bytes=64 * 1024 * 1024,
        ),
    )(*args)

    return out[:M].reshape(B, S, H)


def _reference_no_dropout(x, w_bf16, b, gamma, beta, eps=1e-6):
    mean = x.mean(-1, keepdims=True)
    std = jnp.std(x, axis=-1, keepdims=True, ddof=1)
    normed = gamma * (x - mean) / (std + eps) + beta
    y = jnp.dot(normed.astype(jnp.bfloat16), w_bf16,
                preferred_element_type=jnp.float32) + b
    return x + y


if __name__ == "__main__":
    B, S, H = 2, 8, 32
    dropout = 0.1

    key = jax.random.PRNGKey(0)
    kx, kw = jax.random.split(key)

    x = jax.random.normal(kx, (B, S, H), dtype=jnp.float32)
    # deterministic parameter init; W stored in its bf16 compute dtype
    w = (jax.random.normal(kw, (H, H), dtype=jnp.float32)
         * (1.0 / jnp.sqrt(H))).astype(jnp.bfloat16)
    b = jnp.zeros((1, H), dtype=jnp.float32)
    gamma = jnp.ones((1, H), dtype=jnp.float32)   # LayerNorm a_2
    beta = jnp.zeros((1, H), dtype=jnp.float32)   # LayerNorm b_2

    # correctness check against pure-JAX reference with dropout disabled
    out_nodrop = sublayer_connection(x, w, b, gamma, beta, seed=0,
                                     dropout_p=0.0)
    ref = _reference_no_dropout(x, w, b.reshape(H), gamma.reshape(H),
                                beta.reshape(H))
    out_nodrop = jax.block_until_ready(out_nodrop)
    assert jnp.allclose(out_nodrop, ref, atol=1e-2, rtol=1e-2), \
        "mismatch vs reference"

    # run with dropout active (training-mode, stochastic mask)
    out = sublayer_connection(x, w, b, gamma, beta, seed=42, dropout_p=dropout)
    out = jax.block_until_ready(out)
    assert out.shape == (B, S, H)
    assert bool(jnp.all(jnp.isfinite(out)))

    print("KERNEL_OK")
</pallas_src>

<mosaic_0001>
module attributes {stable_mosaic.version = 11 : i64} {
  func.func @_sublayer_connection_kernel(%arg0: i32, %arg1: memref<16x32xf32, #tpu.memory_space<vmem>>, %arg2: memref<32x32xbf16, #tpu.memory_space<vmem>>, %arg3: memref<1x32xf32, #tpu.memory_space<vmem>>, %arg4: memref<1x32xf32, #tpu.memory_space<vmem>>, %arg5: memref<1x32xf32, #tpu.memory_space<vmem>>, %arg6: memref<16x32xf32, #tpu.memory_space<vmem>>) attributes {dimension_semantics = [#tpu.dimension_semantics<parallel>], iteration_bounds = array<i64: 1>, scalar_prefetch = 0 : i64, scratch_operands = 0 : i64, tpu.core_type = #tpu.core_type<tc>, window_params = [{transform_indices = @transform_0, window_bounds = array<i64: 16, 32>}, {pipeline_mode = #tpu.pipeline_mode<synchronous>, transform_indices = @transform_1, window_bounds = array<i64: 32, 32>}, {pipeline_mode = #tpu.pipeline_mode<synchronous>, transform_indices = @transform_2, window_bounds = array<i64: 1, 32>}, {pipeline_mode = #tpu.pipeline_mode<synchronous>, transform_indices = @transform_3, window_bounds = array<i64: 1, 32>}, {pipeline_mode = #tpu.pipeline_mode<synchronous>, transform_indices = @transform_4, window_bounds = array<i64: 1, 32>}, {transform_indices = @transform_5, window_bounds = array<i64: 16, 32>}]} {
    %c0 = arith.constant 0 : index
    %c0_0 = arith.constant 0 : index
    %0 = vector.load %arg1[%c0, %c0_0] : memref<16x32xf32, #tpu.memory_space<vmem>>, vector<16x32xf32>
    %cst = arith.constant dense<0.000000e+00> : vector<16xf32>
    %1 = vector.multi_reduction <add>, %0, %cst [1] : vector<16x32xf32> to vector<16xf32>
    %2 = vector.shape_cast %1 : vector<16xf32> to vector<16x1xf32>
    %cst_1 = arith.constant 3.200000e+01 : f32
    %3 = vector.broadcast %cst_1 : f32 to vector<16x1xf32>
    %4 = arith.divf %2, %3 : vector<16x1xf32>
    %5 = vector.broadcast %4 : vector<16x1xf32> to vector<16x32xf32>
    %6 = arith.subf %0, %5 : vector<16x32xf32>
    %7 = arith.mulf %6, %6 : vector<16x32xf32>
    %cst_2 = arith.constant dense<0.000000e+00> : vector<16xf32>
    %8 = vector.multi_reduction <add>, %7, %cst_2 [1] : vector<16x32xf32> to vector<16xf32>
    %9 = vector.shape_cast %8 : vector<16xf32> to vector<16x1xf32>
    %cst_3 = arith.constant 0.0322580636 : f32
    %10 = vector.broadcast %cst_3 : f32 to vector<16x1xf32>
    %11 = arith.mulf %9, %10 : vector<16x1xf32>
    %12 = math.sqrt %11 : vector<16x1xf32>
    %cst_4 = arith.constant 9.99999997E-7 : f32
    %13 = vector.broadcast %cst_4 : f32 to vector<16x1xf32>
    %14 = arith.addf %12, %13 : vector<16x1xf32>
    %cst_5 = arith.constant 1.000000e+00 : f32
    %15 = vector.broadcast %cst_5 : f32 to vector<16x1xf32>
    %16 = arith.divf %15, %14 : vector<16x1xf32>
    %c0_6 = arith.constant 0 : index
    %c0_7 = arith.constant 0 : index
    %17 = vector.load %arg4[%c0_6, %c0_7] : memref<1x32xf32, #tpu.memory_space<vmem>>, vector<1x32xf32>
    %18 = vector.broadcast %16 : vector<16x1xf32> to vector<16x32xf32>
    %19 = arith.mulf %6, %18 : vector<16x32xf32>
    %20 = vector.broadcast %17 : vector<1x32xf32> to vector<16x32xf32>
    %21 = arith.mulf %20, %19 : vector<16x32xf32>
    %c0_8 = arith.constant 0 : index
    %c0_9 = arith.constant 0 : index
    %22 = vector.load %arg5[%c0_8, %c0_9] : memref<1x32xf32, #tpu.memory_space<vmem>>, vector<1x32xf32>
    %23 = vector.broadcast %22 : vector<1x32xf32> to vector<16x32xf32>
    %24 = arith.addf %21, %23 : vector<16x32xf32>
    %25 = arith.truncf %24 : vector<16x32xf32> to vector<16x32xbf16>
    %c0_10 = arith.constant 0 : index
    %c0_11 = arith.constant 0 : index
    %26 = vector.load %arg2[%c0_10, %c0_11] : memref<32x32xbf16, #tpu.memory_space<vmem>>, vector<32x32xbf16>
    %cst_12 = arith.constant dense<0.000000e+00> : vector<16x32xf32>
    %27 = tpu.matmul %25, %26, %cst_12 {dimension_numbers = #tpu.dot_dimension_numbers<[1], [0], [0], [1], [0, 0, 1, 1], [], []>} : vector<16x32xbf16>, vector<32x32xbf16>, vector<16x32xf32> -> vector<16x32xf32>
    %c0_13 = arith.constant 0 : index
    %c0_14 = arith.constant 0 : index
    %28 = vector.load %arg3[%c0_13, %c0_14] : memref<1x32xf32, #tpu.memory_space<vmem>>, vector<1x32xf32>
    %29 = vector.broadcast %28 : vector<1x32xf32> to vector<16x32xf32>
    %30 = arith.addf %27, %29 : vector<16x32xf32>
    %31 = arith.addf %0, %30 : vector<16x32xf32>
    %c0_15 = arith.constant 0 : index
    %c0_16 = arith.constant 0 : index
    %32 = vector.load %arg6[%c0_15, %c0_16] : memref<16x32xf32, #tpu.memory_space<vmem>>, vector<16x32xf32>
    tpu.vector_store %arg6[%c0_15, %c0_16], %31 {strides = array<i32>} : memref<16x32xf32, #tpu.memory_space<vmem>>, vector<16x32xf32>,
    return
  }
  func.func @transform_0(%arg0: i32) -> (i32, i32) {
    %c0_i32 = arith.constant 0 : i32
    %c0_i32_0 = arith.constant 0 : i32
    return %arg0, %c0_i32 : i32, i32
  }
  func.func @transform_1(%arg0: i32) -> (i32, i32) {
    %c0_i32 = arith.constant 0 : i32
    %c0_i32_0 = arith.constant 0 : i32
    %c0_i32_1 = arith.constant 0 : i32
    return %c0_i32, %c0_i32_0 : i32, i32
  }
  func.func @transform_2(%arg0: i32) -> (i32, i32) {
    %c0_i32 = arith.constant 0 : i32
    %c0_i32_0 = arith.constant 0 : i32
    %c0_i32_1 = arith.constant 0 : i32
    return %c0_i32, %c0_i32_0 : i32, i32
  }
  func.func @transform_3(%arg0: i32) -> (i32, i32) {
    %c0_i32 = arith.constant 0 : i32
    %c0_i32_0 = arith.constant 0 : i32
    %c0_i32_1 = arith.constant 0 : i32
    return %c0_i32, %c0_i32_0 : i32, i32
  }
  func.func @transform_4(%arg0: i32) -> (i32, i32) {
    %c0_i32 = arith.constant 0 : i32
    %c0_i32_0 = arith.constant 0 : i32
    %c0_i32_1 = arith.constant 0 : i32
    return %c0_i32, %c0_i32_0 : i32, i32
  }
  func.func @transform_5(%arg0: i32) -> (i32, i32) {
    %c0_i32 = arith.constant 0 : i32
    %c0_i32_0 = arith.constant 0 : i32
    return %arg0, %c0_i32 : i32, i32
  }
}

</mosaic_0001>

<llo_original>
// kernel: tpu_custom_call.1
$region0: #{tpu_custom_call.1}
  #allocation0 [shape = 'u32[]', space=smem, size = 0x4, offset = 0x4, fixed_abs, tag = 'smem constant byte address 0x4 - core index']
  #allocation1 [shape = 'u32[144,128]{1,0:T(1,128)}', space=vmem, size = 0x12000, scoped, tag = 'internal scratch']
  %s0 = inlined_call_operand.hbm [shape: f32[16,32], index: 0, kind: input, shape index: {}]
  %s1 = inlined_call_operand.hbm [shape: bf16[32,32], index: 1, kind: input, shape index: {}]
  %s2 = inlined_call_operand.hbm [shape: f32[1,32], index: 2, kind: input, shape index: {}]
  %s3 = inlined_call_operand.hbm [shape: f32[1,32], index: 3, kind: input, shape index: {}]
  %s4 = inlined_call_operand.hbm [shape: f32[1,32], index: 4, kind: input, shape index: {}]
  %s5 = inlined_call_operand.hbm [shape: f32[16,32], index: 5, kind: output, shape index: {}]
  %s6 = sld [smem:[#allocation0]]
  $region50: #{tpu_custom_call.1} parent=0
    _
  %s8 = ssub.s32 1, %s6
  %s9 = scalar_select 0, %s8, %s6
  $region1: #{tpu_custom_call.1} parent=0
    #allocation2 [shape = 'u8[8192]{0}', space=vmem, size = 0x2000, scoped, tag = 'input window, operand 0, single buffered']
    #allocation3 [shape = 's32[1]{0}', space=sflag, size = 0x4, scoped, tag = 'scoped memory for tpu_custom_call.1']
    #allocation4 [shape = 's32[1]{0}', space=sflag, size = 0x4, scoped, tag = 'scoped memory for tpu_custom_call.1']
    #allocation5 [shape = 'u8[8192]{0}', space=vmem, size = 0x2000, scoped, tag = 'input window, operand 1, single buffered']
    #allocation6 [shape = 's32[1]{0}', space=sflag, size = 0x4, scoped, tag = 'scoped memory for tpu_custom_call.1']
    #allocation7 [shape = 'u8[512]{0}', space=vmem, size = 0x400, scoped, tag = 'input window, operand 2, single buffered']
    #allocation8 [shape = 'u8[512]{0}', space=vmem, size = 0x400, scoped, tag = 'input window, operand 3, single buffered']
    #allocation9 [shape = 's32[1]{0}', space=sflag, size = 0x4, scoped, tag = 'scoped memory for tpu_custom_call.1']
    #allocation10 [shape = 'u8[512]{0}', space=vmem, size = 0x400, scoped, tag = 'input window, operand 4, single buffered']
    #allocation11 [shape = 'u8[8192]{0}', space=vmem, size = 0x2000, scoped, tag = 'output window, operand 0, single buffered']
    %10 = vsyncpa [#allocation3], 0
    %11 = vsyncpa [#allocation6], 0
    %12 = vsyncpa [#allocation9], 0
    %13 = vsyncpa [#allocation4], 0
    // Predicated region
    $region2: #{tpu_custom_call.1} parent=1 // pred_check
      _
    $region3: #{tpu_custom_call.1} parent=1 // pred_check_branch
      %15 = sbr.rel (0) target = $region5
    $region4: #{tpu_custom_call.1} parent=1 // pred_region
      %s17 = ssub.s32 256, 256
      %18 = vsyncadd [#allocation3], %s17
      %s19 = sshll.u32 [#allocation2], 4
      %s20 = int_to_ptr.vmem [resolvable:$true] %s19
      %25 = dma.hbm_to_vmem [thread:$0]  %s0, 256, %s20, [#allocation3], 128, 128, 8
    $region5: #{tpu_custom_call.1} parent=1 // pred_fallthru
      _
    // Predicated region
    $region6: #{tpu_custom_call.1} parent=1 // pred_check
      _
    $region7: #{tpu_custom_call.1} parent=1 // pred_check_branch
      %27 = sbr.rel (0) target = $region9
    $region8: #{tpu_custom_call.1} parent=1 // pred_region
      %s29 = ssub.s32 256, 256
      %30 = vsyncadd [#allocation6], %s29
      %s31 = sshll.u32 [#allocation5], 4
      %s32 = int_to_ptr.vmem [resolvable:$true] %s31
      %37 = dma.hbm_to_vmem [thread:$0]  %s1, 256, %s32, [#allocation6], 64, 64, 4
    $region9: #{tpu_custom_call.1} parent=1 // pred_fallthru
      _
    // Predicated region
    $region10: #{tpu_custom_call.1} parent=1 // pred_check
      _
    $region11: #{tpu_custom_call.1} parent=1 // pred_check_branch
      %39 = sbr.rel (0) target = $region13
    $region12: #{tpu_custom_call.1} parent=1 // pred_region
      %s41 = ssub.s32 16, 16
      %42 = vsyncadd [#allocation6], %s41
      %s44 = sshll.u32 [#allocation7], 4
      %s45 = int_to_ptr.vmem [resolvable:$true] %s44
      %47 = dma.hbm_to_vmem [thread:$0]  %s2, 16, %s45, [#allocation6]
    $region13: #{tpu_custom_call.1} parent=1 // pred_fallthru
      _
    // Predicated region
    $region14: #{tpu_custom_call.1} parent=1 // pred_check
      _
    $region15: #{tpu_custom_call.1} parent=1 // pred_check_branch
      %49 = sbr.rel (0) target = $region17
    $region16: #{tpu_custom_call.1} parent=1 // pred_region
      %s51 = ssub.s32 16, 16
      %52 = vsyncadd [#allocation9], %s51
      %s54 = sshll.u32 [#allocation8], 4
      %s55 = int_to_ptr.vmem [resolvable:$true] %s54
      %57 = dma.hbm_to_vmem [thread:$0]  %s3, 16, %s55, [#allocation9]
    $region17: #{tpu_custom_call.1} parent=1 // pred_fallthru
      _
    // Predicated region
    $region18: #{tpu_custom_call.1} parent=1 // pred_check
      _
    $region19: #{tpu_custom_call.1} parent=1 // pred_check_branch
      %59 = sbr.rel (0) target = $region21
    $region20: #{tpu_custom_call.1} parent=1 // pred_region
      %s61 = ssub.s32 16, 16
      %62 = vsyncadd [#allocation9], %s61
      %s64 = sshll.u32 [#allocation10], 4
      %s65 = int_to_ptr.vmem [resolvable:$true] %s64
      %67 = dma.hbm_to_vmem [thread:$0]  %s4, 16, %s65, [#allocation9]
    $region21: #{tpu_custom_call.1} parent=1 // pred_fallthru
      _
    // Predicated region
    $region22: #{tpu_custom_call.1} parent=1 // pred_check
      _
    $region23: #{tpu_custom_call.1} parent=1 // pred_check_branch
      %69 = sbr.rel (0) target = $region25
    $region24: #{tpu_custom_call.1} parent=1 // pred_region
      %70 = dma.done [#allocation3], 256
    $region25: #{tpu_custom_call.1} parent=1 // pred_fallthru
      _
    // Predicated region
    $region26: #{tpu_custom_call.1} parent=1 // pred_check
      _
    $region27: #{tpu_custom_call.1} parent=1 // pred_check_branch
      %72 = sbr.rel (0) target = $region29
    $region28: #{tpu_custom_call.1} parent=1 // pred_region
      %73 = dma.done [#allocation6], 256
    $region29: #{tpu_custom_call.1} parent=1 // pred_fallthru
      _
    // Predicated region
    $region30: #{tpu_custom_call.1} parent=1 // pred_check
      _
    $region31: #{tpu_custom_call.1} parent=1 // pred_check_branch
      %75 = sbr.rel (0) target = $region33
    $region32: #{tpu_custom_call.1} parent=1 // pred_region
      %76 = dma.done [#allocation6], 16
    $region33: #{tpu_custom_call.1} parent=1 // pred_fallthru
      _
    // Predicated region
    $region34: #{tpu_custom_call.1} parent=1 // pred_check
      _
    $region35: #{tpu_custom_call.1} parent=1 // pred_check_branch
      %78 = sbr.rel (0) target = $region37
    $region36: #{tpu_custom_call.1} parent=1 // pred_region
      %79 = dma.done [#allocation9], 16
    $region37: #{tpu_custom_call.1} parent=1 // pred_fallthru
      _
    // Predicated region
    $region38: #{tpu_custom_call.1} parent=1 // pred_check
      _
    $region39: #{tpu_custom_call.1} parent=1 // pred_check_branch
      %81 = sbr.rel (0) target = $region41
    $region40: #{tpu_custom_call.1} parent=1 // pred_region
      %82 = dma.done [#allocation9], 16
    $region41: #{tpu_custom_call.1} parent=1 // pred_fallthru
      _
    %v84 = vld [vmem:[#allocation2] sm:$0xff]
    %v85 = vld [vmem:[#allocation2 + $0x8] sm:$0xff]
    %vm86 = vcmask 261120
    %v87 = vsel %vm86, %v84, 0.0
    %88 = vadd.xlane.f32.xlu0 %v87
    %v89 = vpop.xlane.xlu0 %88
    %v90 = vsel %vm86, %v85, 0.0
    %91 = vadd.xlane.f32.xlu0 %v90
    %v92 = vpop.xlane.xlu0 %91
    %v93 = vrcp.pop 32.0
    %v94 = vmul.f32 %v89, %v93
    %v95 = vmul.f32 %v92, %v93
    %v96 = vsub.f32 %v84, %v94
    %v97 = vsub.f32 %v85, %v95
    %v98 = vmul.f32 %v96, %v96
    %v99 = vmul.f32 %v97, %v97
    %v100 = vsel %vm86, %v98, 0.0
    %101 = vadd.xlane.f32.xlu0 %v100
    %v102 = vpop.xlane.xlu0 %101
    %v103 = vsel %vm86, %v99, 0.0
    %104 = vadd.xlane.f32.xlu0 %v103
    %v105 = vpop.xlane.xlu0 %104
    %v106 = vmul.f32 %v102, 0.032258064
    %v107 = vmul.f32 %v105, 0.032258064
    %v108 = vrsqrt.pop %v106
    %v109 = vmul.f32 %v106, %v108
    %vm110 = vcmp.eq.f32.partialorder %v106, inf
    %v111 = vsel %vm110, %v106, %v109
    %vm112 = vcmp.eq.f32.partialorder %v106, 0.0
    %v113 = vand.u32 %v106, 2147483648
    %v114 = vsel %vm112, %v113, %v111
    %v115 = vrsqrt.pop %v107
    %v116 = vmul.f32 %v107, %v115
    %vm117 = vcmp.eq.f32.partialorder %v107, inf
    %v118 = vsel %vm117, %v107, %v116
    %vm119 = vcmp.eq.f32.partialorder %v107, 0.0
    %v120 = vand.u32 %v107, 2147483648
    %v121 = vsel %vm119, %v120, %v118
    %v122 = vadd.f32 %v114, 1e-06
    %v123 = vadd.f32 %v121, 1e-06
    %v124 = vrcp.pop %v122
    %v125 = vmul.f32 1.0, %v124
    %v126 = vrcp.pop %v123
    %v127 = vmul.f32 1.0, %v126
    %v128 = vld [vmem:[#allocation8] sm:$0x1]
    %v129 = vmul.f32 %v96, %v125
    %v130 = vmul.f32 %v97, %v127
    %v132 = vlaneseq
    %v133 = vshrl.u32 %v132, 7
    %v134 = vsub.s32 0, %v133
    %v135 = vrot.slane %v128, %v134
    %v137 = vmul.f32 %v135, %v129
    %v138 = vmul.f32 %v135, %v130
    %v139 = vld [vmem:[#allocation10] sm:$0x1]
    %v141 = vlaneseq
    %v142 = vshrl.u32 %v141, 7
    %v143 = vsub.s32 0, %v142
    %v144 = vrot.slane %v139, %v143
    %v146 = vadd.f32 %v137, %v144
    %v147 = vadd.f32 %v138, %v144
    %v148 = vpack.c.bf16 %v147, %v146
    %v149 = vld [vmem:[#allocation5] sm:$0xf]
    %v150 = vld [vmem:[#allocation5 + $0x4] sm:$0xf]
    %v151 = vld [vmem:[#allocation5 + $0x8] sm:$0xf]
    %v152 = vld [vmem:[#allocation5 + $0xc] sm:$0xf]
    %v153 = vld [vmem:[#allocation7] sm:$0x1]
    %v155 = vlaneseq
    %v156 = vshrl.u32 %v155, 7
    %v157 = vsub.s32 0, %v156
    %v158 = vrot.slane %v153, %v157
    %v164 = vunpack.c.l.b16 %v149
    %v165 = vunpack.c.l.b16 %v150
    %v166 = vunpack.c.l.b16 %v151
    %v167 = vunpack.c.l.b16 %v152
    %v168 = vpack.c.b16 %v165, %v164
    %v169 = vpack.c.b16 %v167, %v166
    %v173 = vsel %vm86, %v148, 0
    %175 = vmatprep.subr.bf16.mxu0 0
    %176 = vmatpush1.bf16.msra.mxu0 %v168
    %177 = vmatprep.subr.bf16.mxu0 0
    %178 = vmatpush1.bf16.msra.mxu0 %v169
    %179 = vmatprep.subr.bf16.mxu0 0
    %180 = vmatpush1.bf16.msra.mxu0 0
    %181 = vmatprep.subr.bf16.mxu0 0
    %182 = vmatpush1.bf16.msra.mxu0 0
    %183 = vmatprep.subr.bf16.mxu0 0
    %184 = vmatpush1.bf16.msra.mxu0 0
    %185 = vmatprep.subr.bf16.mxu0 0
    %186 = vmatpush1.bf16.msra.mxu0 0
    %187 = vmatprep.subr.bf16.mxu0 0
    %188 = vmatpush1.bf16.msra.mxu0 0
    %189 = vmatprep.subr.bf16.mxu0 0
    %190 = vmatpush1.bf16.msra.mxu0 0
    %191 = vmatprep.subr.bf16.mxu0 0
    %192 = vmatpush1.bf16.msra.mxu0 0
    %193 = vmatprep.subr.bf16.mxu0 0
    %194 = vmatpush1.bf16.msra.mxu0 0
    %195 = vmatprep.subr.bf16.mxu0 0
    %196 = vmatpush1.bf16.msra.mxu0 0
    %197 = vmatprep.subr.bf16.mxu0 0
    %198 = vmatpush1.bf16.msra.mxu0 0
    %199 = vmatprep.subr.bf16.mxu0 0
    %200 = vmatpush1.bf16.msra.mxu0 0
    %201 = vmatprep.subr.bf16.mxu0 0
    %202 = vmatpush1.bf16.msra.mxu0 0
    %203 = vmatprep.subr.bf16.mxu0 0
    %204 = vmatpush1.bf16.msra.mxu0 0
    %205 = vmatprep.subr.bf16.mxu0 0
    %206 = vmatpush1.bf16.msra.mxu0 0
    %207 = vmatprep.mubr.bf16.mxu0 0
    %208 = vmatmul.mubr.bf16.gmra.mrb[0].mxu0 %v173
    %v209 = vpop.f32.mrb[0].mxu0
    %v210 = vadd.f32 %v158, %v209
    %v211 = vpop.f32.mrb[0].mxu0
    %v212 = vpop.f32.mrb[0].mxu0
    %v213 = vadd.f32 %v158, %v212
    %v214 = vpop.f32.mrb[0].mxu0
    %215 = vdwg.mxu0
    %v216 = vadd.f32 %v84, %v210
    %v217 = vadd.f32 %v85, %v213
    %218 = vst.msk [vmem:[#allocation11] sm:$0xff] %vm86, %v216
    %219 = vst.msk [vmem:[#allocation11 + $0x8] sm:$0xff] %vm86, %v217
    // Predicated region
    $region42: #{tpu_custom_call.1} parent=1 // pred_check
      _
    $region43: #{tpu_custom_call.1} parent=1 // pred_check_branch
      %221 = sbr.rel (0) target = $region45
    $region44: #{tpu_custom_call.1} parent=1 // pred_region
      %s223 = ssub.s32 256, 256
      %224 = vsyncadd [#allocation4], %s223
      %s225 = sshll.u32 [#allocation11], 4
      %s226 = int_to_ptr.vmem [resolvable:$true] %s225
      %231 = dma.vmem_to_hbm [thread:$0]  %s226, 256, %s5, [#allocation4], 128, 128, 8
    $region45: #{tpu_custom_call.1} parent=1 // pred_fallthru
      _
    // Predicated region
    $region46: #{tpu_custom_call.1} parent=1 // pred_check
      _
    $region47: #{tpu_custom_call.1} parent=1 // pred_check_branch
      %233 = sbr.rel (0) target = $region49
    $region48: #{tpu_custom_call.1} parent=1 // pred_region
      %234 = dma.done [#allocation4], 256
    $region49: #{tpu_custom_call.1} parent=1 // pred_fallthru
      _
    %235 = vsyncpa [#allocation3], 1
    %236 = vsyncpa [#allocation6], 1
    %237 = vsyncpa [#allocation9], 1
    %238 = vsyncpa [#allocation4], 1

</llo_original>
